<compile_context>
chip_gen: v7x
topology: tpu7x:2x2x1
jax: 0.10.0
libtpu: 0.0.40
codegen_flags: <defaults>
</compile_context>

<pallas_src>
import jax
import jax.numpy as jnp
from jax.experimental import pallas as pl
from jax.experimental.pallas import tpu as pltpu


# ----------------------------- kernels --------------------------------------

def _conv1_kernel(a_ref, emb_ref, w1_ref, b1_ref, x_ref):
    """x[i] = relu((A_n2e[i, :] @ E) @ W1 + b1) for one row tile i."""
    agg = jnp.dot(a_ref[...], emb_ref[...], preferred_element_type=jnp.float32)
    h = jnp.dot(agg.astype(jnp.bfloat16), w1_ref[...],
                preferred_element_type=jnp.float32)
    h = jnp.maximum(h + b1_ref[...], 0.0)
    x_ref[...] = h.astype(x_ref.dtype)          # bf16 intermediate for pass 2


def _make_conv2_kernel(b_broad):
    """out[i] = alpha * (A_hyper[i,:] @ x) + (A_e2n[i,:] @ x)  (B_Broad path)."""
    def kernel(ah_ref, ae_ref, x_ref, alpha_ref, out_ref):
        x = x_ref[...]
        x1 = jnp.dot(ah_ref[...], x, preferred_element_type=jnp.float32)
        if b_broad:
            x2 = jnp.dot(ae_ref[...], x, preferred_element_type=jnp.float32)
            out = alpha_ref[0, 0] * x1 + x2
        else:
            out = x1
        out_ref[...] = out.astype(out_ref.dtype)
    return kernel


# ----------------------------- wrapper ---------------------------------------

def _round_up(x, m):
    return ((x + m - 1) // m) * m


def _pad2(a, rows, cols):
    r, c = a.shape
    return jnp.pad(a, ((0, rows - r), (0, cols - c)))


def directed_hgae_forward(emb, a_n2e, a_hyper, a_e2n, w1, b1, alpha,
                          *, b_broad=True, block_rows=128):
    """Dense DirectedHGAE forward over M = #nodes + #hyperedges entities."""
    M, F = emb.shape
    assert a_n2e.shape == (M, M) and a_hyper.shape == (M, M) and a_e2n.shape == (M, M)
    assert w1.shape == (F, F) and b1.shape == (F,)
    tm = block_rows
    assert tm >= 16 and tm % 16 == 0, "row tile must be a multiple of 16 (bf16 sublanes)"

    mp = _round_up(M, tm)          # padded entity count (row-tileable)
    fp = _round_up(F, 128)         # lane-dense feature width
    n_tiles = mp // tm

    # bf16 MXU operands, zero-padded to lane-dense shapes.
    emb_p = _pad2(emb.astype(jnp.bfloat16), mp, fp)
    a_n2e_p = _pad2(a_n2e.astype(jnp.bfloat16), mp, mp)
    a_hyper_p = _pad2(a_hyper.astype(jnp.bfloat16), mp, mp)
    a_e2n_p = _pad2(a_e2n.astype(jnp.bfloat16), mp, mp)
    w1_p = _pad2(w1.astype(jnp.bfloat16), fp, fp)
    b1_p = _pad2(b1.astype(jnp.float32).reshape(1, F), 1, fp)
    alpha_p = jnp.asarray(alpha, jnp.float32).reshape(1, 1)

    cparams = pltpu.CompilerParams(
        dimension_semantics=("parallel",),       # megacore-shardable row axis
        vmem_limit_bytes=32 * 1024 * 1024,
    )

    # ---- pass 1: conv1 (edge construction), row-tiled over entities --------
    x = pl.pallas_call(
        _conv1_kernel,
        out_shape=jax.ShapeDtypeStruct((mp, fp), jnp.bfloat16),
        grid=(n_tiles,),
        in_specs=[
            pl.BlockSpec((tm, mp), lambda i: (i, 0)),   # A_n2e row panel (streamed)
            pl.BlockSpec((mp, fp), lambda i: (0, 0)),   # E (resident)
            pl.BlockSpec((fp, fp), lambda i: (0, 0)),   # W1 (resident)
            pl.BlockSpec((1, fp), lambda i: (0, 0)),    # b1
        ],
        out_specs=pl.BlockSpec((tm, fp), lambda i: (i, 0)),
        compiler_params=cparams,
    )(a_n2e_p, emb_p, w1_p, b1_p)

    # ---- pass 2: conv2 twice + alpha-combine, row-tiled over entities ------
    out = pl.pallas_call(
        _make_conv2_kernel(b_broad),
        out_shape=jax.ShapeDtypeStruct((mp, fp), jnp.float32),
        grid=(n_tiles,),
        in_specs=[
            pl.BlockSpec((tm, mp), lambda i: (i, 0)),   # A_hyper row panel
            pl.BlockSpec((tm, mp), lambda i: (i, 0)),   # A_e2n row panel
            pl.BlockSpec((mp, fp), lambda i: (0, 0)),   # x (resident, bf16)
            pl.BlockSpec((1, 1), lambda i: (0, 0)),     # alpha
        ],
        out_specs=pl.BlockSpec((tm, fp), lambda i: (i, 0)),
        compiler_params=cparams,
    )(a_hyper_p, a_e2n_p, x, alpha_p)

    return out[:M, :F]


# ----------------------------- reference -------------------------------------

def _reference_forward(emb, a_n2e, a_hyper, a_e2n, w1, b1, alpha, b_broad=True):
    """Pure-JAX reference with the same bf16 operand rounding as the kernel."""
    bf = lambda a: a.astype(jnp.bfloat16).astype(jnp.float32)
    agg = bf(a_n2e) @ bf(emb)
    x = jnp.maximum(bf(agg) @ bf(w1) + b1, 0.0)
    x = bf(x)
    x1 = bf(a_hyper) @ x
    x2 = bf(a_e2n) @ x
    return alpha * x1 + x2 if b_broad else x1


# ----------------------------- demo ------------------------------------------

if __name__ == "__main__":
    nums = 64                  # hypergraph nodes (== #hyperedges in the module)
    out_feats = 64             # DiHGAEConvEdge_withoutfts out_feats
    M = 2 * nums               # combined node + hyperedge index space

    key = jax.random.PRNGKey(0)
    k_inc, k_emb, k_w, k_b = jax.random.split(key, 4)

    # dense analogue of edge_index_nodetoedge: sparse node->hyperedge incidence
    inc = (jax.random.uniform(k_inc, (nums, nums)) < 0.08).astype(jnp.float32)
    inc = jnp.maximum(inc, jnp.eye(nums, dtype=jnp.float32))

    def row_norm(a):
        return a / jnp.maximum(a.sum(axis=1, keepdims=True), 1.0)

    eye_m = jnp.eye(M, dtype=jnp.float32)
    a_n2e = jnp.zeros((M, M), jnp.float32).at[nums:, :nums].set(inc.T)
    a_n2e = row_norm(a_n2e + eye_m)                 # node -> hyperedge (+ self)
    a_e2n = jnp.zeros((M, M), jnp.float32).at[:nums, nums:].set(inc)
    a_e2n = row_norm(a_e2n + eye_m)                 # edge -> node (+ self)
    idx = jnp.arange(nums)
    a_hyper = jnp.zeros((M, M), jnp.float32).at[idx, nums + idx].set(1.0)

    emb = jax.random.normal(k_emb, (M, out_feats), jnp.float32)
    stdv = 1.0 / (out_feats ** 0.5)
    w1 = jax.random.uniform(k_w, (out_feats, out_feats), jnp.float32, -stdv, stdv)
    b1 = jax.random.uniform(k_b, (out_feats,), jnp.float32, -stdv, stdv)
    alpha = 1.0                 # self.alpha initial value (learnable scalar)

    out = directed_hgae_forward(emb, a_n2e, a_hyper, a_e2n, w1, b1, alpha,
                                b_broad=True, block_rows=64)
    out = jax.block_until_ready(out)

    ref = _reference_forward(emb, a_n2e, a_hyper, a_e2n, w1, b1, alpha, True)
    assert out.shape == (M, out_feats) and out.dtype == jnp.float32
    assert bool(jnp.all(jnp.isfinite(out)))
    assert bool(jnp.allclose(out, ref, atol=5e-2, rtol=5e-2))
    print("KERNEL_OK")
</pallas_src>

<mosaic_0001>
module attributes {stable_mosaic.version = 11 : i64} {
  func.func @_conv1_kernel(%arg0: i32, %arg1: memref<64x128xbf16, #tpu.memory_space<vmem>>, %arg2: memref<128x128xbf16, #tpu.memory_space<vmem>>, %arg3: memref<128x128xbf16, #tpu.memory_space<vmem>>, %arg4: memref<1x128xf32, #tpu.memory_space<vmem>>, %arg5: memref<64x128xbf16, #tpu.memory_space<vmem>>) attributes {dimension_semantics = [#tpu.dimension_semantics<parallel>], iteration_bounds = array<i64: 2>, scalar_prefetch = 0 : i64, scratch_operands = 0 : i64, tpu.core_type = #tpu.core_type<tc>, window_params = [{transform_indices = @transform_0, window_bounds = array<i64: 64, 128>}, {pipeline_mode = #tpu.pipeline_mode<synchronous>, transform_indices = @transform_1, window_bounds = array<i64: 128, 128>}, {pipeline_mode = #tpu.pipeline_mode<synchronous>, transform_indices = @transform_2, window_bounds = array<i64: 128, 128>}, {pipeline_mode = #tpu.pipeline_mode<synchronous>, transform_indices = @transform_3, window_bounds = array<i64: 1, 128>}, {transform_indices = @transform_4, window_bounds = array<i64: 64, 128>}]} {
    %c0 = arith.constant 0 : index
    %c0_0 = arith.constant 0 : index
    %0 = vector.load %arg1[%c0, %c0_0] : memref<64x128xbf16, #tpu.memory_space<vmem>>, vector<64x128xbf16>
    %c0_1 = arith.constant 0 : index
    %c0_2 = arith.constant 0 : index
    %1 = vector.load %arg2[%c0_1, %c0_2] : memref<128x128xbf16, #tpu.memory_space<vmem>>, vector<128x128xbf16>
    %cst = arith.constant dense<0.000000e+00> : vector<64x128xf32>
    %2 = tpu.matmul %0, %1, %cst {dimension_numbers = #tpu.dot_dimension_numbers<[1], [0], [0], [1], [0, 0, 1, 1], [], []>} : vector<64x128xbf16>, vector<128x128xbf16>, vector<64x128xf32> -> vector<64x128xf32>
    %3 = arith.truncf %2 : vector<64x128xf32> to vector<64x128xbf16>
    %c0_3 = arith.constant 0 : index
    %c0_4 = arith.constant 0 : index
    %4 = vector.load %arg3[%c0_3, %c0_4] : memref<128x128xbf16, #tpu.memory_space<vmem>>, vector<128x128xbf16>
    %cst_5 = arith.constant dense<0.000000e+00> : vector<64x128xf32>
    %5 = tpu.matmul %3, %4, %cst_5 {dimension_numbers = #tpu.dot_dimension_numbers<[1], [0], [0], [1], [0, 0, 1, 1], [], []>} : vector<64x128xbf16>, vector<128x128xbf16>, vector<64x128xf32> -> vector<64x128xf32>
    %c0_6 = arith.constant 0 : index
    %c0_7 = arith.constant 0 : index
    %6 = vector.load %arg4[%c0_6, %c0_7] : memref<1x128xf32, #tpu.memory_space<vmem>>, vector<1x128xf32>
    %7 = vector.broadcast %6 : vector<1x128xf32> to vector<64x128xf32>
    %8 = arith.addf %5, %7 : vector<64x128xf32>
    %cst_8 = arith.constant 0.000000e+00 : f32
    %9 = vector.broadcast %cst_8 : f32 to vector<64x128xf32>
    %10 = arith.maximumf %8, %9 : vector<64x128xf32>
    %11 = arith.truncf %10 : vector<64x128xf32> to vector<64x128xbf16>
    %c0_9 = arith.constant 0 : index
    %c0_10 = arith.constant 0 : index
    %12 = vector.load %arg5[%c0_9, %c0_10] : memref<64x128xbf16, #tpu.memory_space<vmem>>, vector<64x128xbf16>
    tpu.vector_store %arg5[%c0_9, %c0_10], %11 {strides = array<i32>} : memref<64x128xbf16, #tpu.memory_space<vmem>>, vector<64x128xbf16>,
    return
  }
  func.func @transform_0(%arg0: i32) -> (i32, i32) {
    %c0_i32 = arith.constant 0 : i32
    %c0_i32_0 = arith.constant 0 : i32
    return %arg0, %c0_i32 : i32, i32
  }
  func.func @transform_1(%arg0: i32) -> (i32, i32) {
    %c0_i32 = arith.constant 0 : i32
    %c0_i32_0 = arith.constant 0 : i32
    %c0_i32_1 = arith.constant 0 : i32
    return %c0_i32, %c0_i32_0 : i32, i32
  }
  func.func @transform_2(%arg0: i32) -> (i32, i32) {
    %c0_i32 = arith.constant 0 : i32
    %c0_i32_0 = arith.constant 0 : i32
    %c0_i32_1 = arith.constant 0 : i32
    return %c0_i32, %c0_i32_0 : i32, i32
  }
  func.func @transform_3(%arg0: i32) -> (i32, i32) {
    %c0_i32 = arith.constant 0 : i32
    %c0_i32_0 = arith.constant 0 : i32
    %c0_i32_1 = arith.constant 0 : i32
    return %c0_i32, %c0_i32_0 : i32, i32
  }
  func.func @transform_4(%arg0: i32) -> (i32, i32) {
    %c0_i32 = arith.constant 0 : i32
    %c0_i32_0 = arith.constant 0 : i32
    return %arg0, %c0_i32 : i32, i32
  }
}

</mosaic_0001>

<llo_original>
// kernel: tpu_custom_call.1
$region0: #{tpu_custom_call.1}
  #allocation0 [shape = 'u32[]', space=smem, size = 0x4, offset = 0x4, fixed_abs, tag = 'smem constant byte address 0x4 - core index']
  #allocation1 [shape = 'u32[144,128]{1,0:T(1,128)}', space=vmem, size = 0x12000, scoped, tag = 'internal scratch']
  %s0 = inlined_call_operand.hbm [shape: bf16[128,128], index: 0, kind: input, shape index: {}]
  %s1 = inlined_call_operand.hbm [shape: bf16[128,128], index: 1, kind: input, shape index: {}]
  %s2 = inlined_call_operand.hbm [shape: bf16[128,128], index: 2, kind: input, shape index: {}]
  %s3 = inlined_call_operand.vmem [shape: f32[1,128], index: 3, kind: input, shape index: {}]
  %s4 = inlined_call_operand.hbm [shape: bf16[128,128], index: 4, kind: output, shape index: {}]
  %s5 = sld [smem:[#allocation0]]
  $region61: #{tpu_custom_call.1} parent=0
    _
  %s7 = ssub.s32 1, %s5
  %s8 = scalar_select 0, %s7, %s5
  $region1: #{tpu_custom_call.1} parent=0
    #allocation2 [shape = 'u8[32768]{0}', space=vmem, size = 0x8000, scoped, tag = 'input window, operand 0']
    #allocation3 [shape = 's32[2]{0}', space=sflag, size = 0x8, scoped, tag = 'scoped memory for tpu_custom_call.1']
    #allocation4 [shape = 's32[2]{0}', space=sflag, size = 0x8, scoped, tag = 'scoped memory for tpu_custom_call.1']
    #allocation5 [shape = 'u8[32768]{0}', space=vmem, size = 0x8000, scoped, tag = 'input window, operand 1, single buffered']
    #allocation6 [shape = 's32[1]{0}', space=sflag, size = 0x4, scoped, tag = 'scoped memory for tpu_custom_call.1']
    #allocation7 [shape = 'u8[32768]{0}', space=vmem, size = 0x8000, scoped, tag = 'input window, operand 2, single buffered']
    #allocation8 [shape = 'u8[32768]{0}', space=vmem, size = 0x8000, scoped, tag = 'output window, operand 0']
    %9 = vsyncpa [#allocation3], 0
    %s10 = scalar_lea.sflag [#allocation3], 1
    %11 = vsyncpa %s10, 0
    %12 = vsyncpa [#allocation6], 0
    %13 = vsyncpa [#allocation4], 0
    %s14 = scalar_lea.sflag [#allocation4], 1
    %15 = vsyncpa %s14, 0
    loop: start=0, step=1, limit=4
    $region2: #{tpu_custom_call.1} parent=1 // loop_pre_header
      _
    $region3: #{tpu_custom_call.1} parent=1 // loop_header
      %s17 = sphi 0, %s21
      %p18 = scmp.ge.s32.totalorder %s17, 4
      %s27 = sphi 0, %s29
      %s30 = sphi 0, %s27
      %s31 = sphi 0, %s30
      %s47 = sphi 0, %s31
      %s51 = sphi 0, %s51
      %s53 = sphi 0, %s51
      %s54 = sphi 0, %s53
      %s68 = sphi 0, %s54
      %s72 = sphi 0, %s72
      %s74 = sphi 0, %s72
      %s75 = sphi 0, %s74
      %s89 = sphi 0, %s75
      %s93 = sphi 0, %s93
      %s95 = sphi 0, %s93
      %s96 = sphi 0, %s95
      %s110 = sphi 0, %s96
      %s116 = sphi 0, %s118
      %s119 = sphi 0, %s116
      %s120 = sphi 0, %s119
      %s136 = sphi 0, %s120
    $region4: #{tpu_custom_call.1} parent=1 // loop_header_branch
      %20 = sbr.rel (%p18) target = $region8
    $region5: #{tpu_custom_call.1} parent=1 // loop_body
      %s22 = ssub.s32 %s17, 1
      %s23 = ssub.s32 %s17, 2
      %s24 = sadd.s32 %s17, 1
      %s25 = ssub.s32 %s17, %s24
      %p26 = scmp.eq.s32.totalorder %s25, 0
      %s28 = sadd.s32 %s27, 1
      %s29 = scalar_select %p26, %s27, %s28
      %p32 = pneg %p26
      %p33 = scmp.eq.s32.totalorder %s17, 1
      %p34 = por %p32, %p33
      %p35 = scmp.ne.s32.totalorder %s27, %s30
      %p36 = scmp.eq.s32.totalorder %s17, 0
      %p37 = por %p35, %p36
      %p38 = scmp.ne.s32.totalorder %s27, %s30
      %p39 = scmp.eq.s32.totalorder %s22, 1
      %p40 = por %p38, %p39
      %p41 = scmp.ne.s32.totalorder %s30, %s31
      %p42 = scmp.eq.s32.totalorder %s22, 0
      %p43 = por %p41, %p42
      %p44 = scmp.ne.s32.totalorder %s30, %s31
      %p45 = scmp.eq.s32.totalorder %s23, 1
      %p46 = por %p44, %p45
      %p48 = scmp.ne.s32.totalorder %s31, %s47
      %p49 = scmp.eq.s32.totalorder %s23, 0
      %p50 = por %p48, %p49
      %s52 = sadd.s32 %s51, 1
      %p55 = scmp.eq.s32.totalorder %s17, 1
      %p56 = scmp.ne.s32.totalorder %s51, %s53
      %p57 = scmp.eq.s32.totalorder %s17, 0
      %p58 = por %p56, %p57
      %p59 = scmp.ne.s32.totalorder %s51, %s53
      %p60 = scmp.eq.s32.totalorder %s22, 1
      %p61 = por %p59, %p60
      %p62 = scmp.ne.s32.totalorder %s53, %s54
      %p63 = scmp.eq.s32.totalorder %s22, 0
      %p64 = por %p62, %p63
      %p65 = scmp.ne.s32.totalorder %s53, %s54
      %p66 = scmp.eq.s32.totalorder %s23, 1
      %p67 = por %p65, %p66
      %p69 = scmp.ne.s32.totalorder %s54, %s68
      %p70 = scmp.eq.s32.totalorder %s23, 0
      %p71 = por %p69, %p70
      %s73 = sadd.s32 %s72, 1
      %p76 = scmp.eq.s32.totalorder %s17, 1
      %p77 = scmp.ne.s32.totalorder %s72, %s74
      %p78 = scmp.eq.s32.totalorder %s17, 0
      %p79 = por %p77, %p78
      %p80 = scmp.ne.s32.totalorder %s72, %s74
      %p81 = scmp.eq.s32.totalorder %s22, 1
      %p82 = por %p80, %p81
      %p83 = scmp.ne.s32.totalorder %s74, %s75
      %p84 = scmp.eq.s32.totalorder %s22, 0
      %p85 = por %p83, %p84
      %p86 = scmp.ne.s32.totalorder %s74, %s75
      %p87 = scmp.eq.s32.totalorder %s23, 1
      %p88 = por %p86, %p87
      %p90 = scmp.ne.s32.totalorder %s75, %s89
      %p91 = scmp.eq.s32.totalorder %s23, 0
      %p92 = por %p90, %p91
      %s94 = sadd.s32 %s93, 1
      %p97 = scmp.eq.s32.totalorder %s17, 1
      %p98 = scmp.ne.s32.totalorder %s93, %s95
      %p99 = scmp.eq.s32.totalorder %s17, 0
      %p100 = por %p98, %p99
      %p101 = scmp.ne.s32.totalorder %s93, %s95
      %p102 = scmp.eq.s32.totalorder %s22, 1
      %p103 = por %p101, %p102
      %p104 = scmp.ne.s32.totalorder %s95, %s96
      %p105 = scmp.eq.s32.totalorder %s22, 0
      %p106 = por %p104, %p105
      %p107 = scmp.ne.s32.totalorder %s95, %s96
      %p108 = scmp.eq.s32.totalorder %s23, 1
      %p109 = por %p107, %p108
      %p111 = scmp.ne.s32.totalorder %s96, %s110
      %p112 = scmp.eq.s32.totalorder %s23, 0
      %p113 = por %p111, %p112
      %s114 = ssub.s32 %s17, %s24
      %p115 = scmp.eq.s32.totalorder %s114, 0
      %s117 = sadd.s32 %s116, 1
      %s118 = scalar_select %p115, %s116, %s117
      %p121 = pneg %p115
      %p122 = scmp.eq.s32.totalorder %s17, 1
      %p123 = por %p121, %p122
      %p124 = scmp.ne.s32.totalorder %s116, %s119
      %p125 = scmp.eq.s32.totalorder %s17, 0
      %p126 = por %p124, %p125
      %p127 = scmp.ne.s32.totalorder %s116, %s119
      %p128 = scmp.eq.s32.totalorder %s22, 1
      %p129 = por %p127, %p128
      %p130 = scmp.ne.s32.totalorder %s119, %s120
      %p131 = scmp.eq.s32.totalorder %s22, 0
      %p132 = por %p130, %p131
      %p133 = scmp.ne.s32.totalorder %s119, %s120
      %p134 = scmp.eq.s32.totalorder %s23, 1
      %p135 = por %p133, %p134
      %p137 = scmp.ne.s32.totalorder %s120, %s136
      %p138 = scmp.eq.s32.totalorder %s23, 0
      %p139 = por %p137, %p138
      %p140 = scmp.le.s32.totalorder 1, %s17
      %p141 = scmp.lt.s32.totalorder %s17, 3
      %p142 = pnand %p140, %p141
      %p143 = pneg %p142
      // Predicated region
      $region9: #{tpu_custom_call.1} parent=5 // pred_check
        _
      $region10: #{tpu_custom_call.1} parent=5 // pred_check_branch
        %145 = sbr.rel (%p142) target = $region12
      $region11: #{tpu_custom_call.1} parent=5 // pred_region
        %s146 = ssub.s32 %s17, 1
        // Predicated region
        $region13: #{tpu_custom_call.1} parent=11 // pred_check
          %p147 = pneg %p64
        $region14: #{tpu_custom_call.1} parent=11 // pred_check_branch
          %149 = sbr.rel (%p147) target = $region16
        $region15: #{tpu_custom_call.1} parent=11 // pred_region
          %s151 = ssub.s32 1024, 1024
          %152 = vsyncadd [#allocation6], %s151
          %s153 = sshll.u32 [#allocation5], 4
          %s154 = int_to_ptr.vmem [resolvable:$true] %s153
          %159 = dma.hbm_to_vmem [thread:$0]  %s1, 1024, %s154, [#allocation6], 64, 64, 4
        $region16: #{tpu_custom_call.1} parent=11 // pred_fallthru
          _
        // Predicated region
        $region17: #{tpu_custom_call.1} parent=11 // pred_check
          %p160 = pneg %p85
        $region18: #{tpu_custom_call.1} parent=11 // pred_check_branch
          %162 = sbr.rel (%p160) target = $region20
        $region19: #{tpu_custom_call.1} parent=11 // pred_region
          %s164 = ssub.s32 1024, 1024
          %165 = vsyncadd [#allocation6], %s164
          %s166 = sshll.u32 [#allocation7], 4
          %s167 = int_to_ptr.vmem [resolvable:$true] %s166
          %172 = dma.hbm_to_vmem [thread:$0]  %s2, 1024, %s167, [#allocation6], 64, 64, 4
        $region20: #{tpu_custom_call.1} parent=11 // pred_fallthru
          _
        // Predicated region
        $region21: #{tpu_custom_call.1} parent=11 // pred_check
          %p173 = pneg %p106
        $region22: #{tpu_custom_call.1} parent=11 // pred_check_branch
          %175 = sbr.rel (%p173) target = $region24
        $region23: #{tpu_custom_call.1} parent=11 // pred_region
          _
        $region24: #{tpu_custom_call.1} parent=11 // pred_fallthru
          _
      $region12: #{tpu_custom_call.1} parent=5 // pred_fallthru
        _
      %p176 = scmp.lt.s32.totalorder %s17, 2
      // Predicated region
      $region25: #{tpu_custom_call.1} parent=5 // pred_check
        %p177 = pneg %p176
      $region26: #{tpu_custom_call.1} parent=5 // pred_check_branch
        %179 = sbr.rel (%p177) target = $region28
      $region27: #{tpu_custom_call.1} parent=5 // pred_region
        // Predicated region
        $region29: #{tpu_custom_call.1} parent=27 // pred_check
          %p180 = pneg %p37
        $region30: #{tpu_custom_call.1} parent=27 // pred_check_branch
          %182 = sbr.rel (%p180) target = $region32
        $region31: #{tpu_custom_call.1} parent=27 // pred_region
          %s183 = sand.u32 %s27, 1
          %s184 = scalar_lea.sflag [#allocation3], %s183
          %s185 = sand.u32 %s27, 1
          %s186 = smul.addr %s185, 32
          %s187 = scalar_lea.vmem [#allocation2], %s186
          %s188 = smul.u32 8, %s17
          %s190 = ssub.s32 512, 512
          %191 = vsyncadd %s184, %s190
          %s192 = smul.addr %s188, 64
          %s193 = scalar_lea.hbm %s0, %s192
          %s194 = sshll.u32 %s187, 4
          %s195 = int_to_ptr.vmem [resolvable:$true] %s194
          %200 = dma.hbm_to_vmem [thread:$0]  %s193, 512, %s195, %s184, 64, 64, 4
        $region32: #{tpu_custom_call.1} parent=27 // pred_fallthru
          _
      $region28: #{tpu_custom_call.1} parent=5 // pred_fallthru
        _
      %p201 = scmp.le.s32.totalorder 1, %s17
      %p202 = scmp.lt.s32.totalorder %s17, 3
      %p203 = pnand %p201, %p202
      %p204 = pneg %p203
      // Predicated region
      $region33: #{tpu_custom_call.1} parent=5 // pred_check
        _
      $region34: #{tpu_custom_call.1} parent=5 // pred_check_branch
        %206 = sbr.rel (%p203) target = $region36
      $region35: #{tpu_custom_call.1} parent=5 // pred_region
        %s207 = ssub.s32 %s17, 1
        %s208 = sand.u32 %s30, 1
        %s209 = scalar_lea.sflag [#allocation3], %s208
        %s210 = sand.u32 %s30, 1
        %s211 = smul.addr %s210, 32
        %s212 = scalar_lea.vmem [#allocation2], %s211
        // Predicated region
        $region37: #{tpu_custom_call.1} parent=35 // pred_check
          %p213 = pneg %p43
        $region38: #{tpu_custom_call.1} parent=35 // pred_check_branch
          %215 = sbr.rel (%p213) target = $region40
        $region39: #{tpu_custom_call.1} parent=35 // pred_region
          %216 = dma.done %s209, 512
        $region40: #{tpu_custom_call.1} parent=35 // pred_fallthru
          _
        // Predicated region
        $region41: #{tpu_custom_call.1} parent=35 // pred_check
          %p217 = pneg %p64
        $region42: #{tpu_custom_call.1} parent=35 // pred_check_branch
          %219 = sbr.rel (%p217) target = $region44
        $region43: #{tpu_custom_call.1} parent=35 // pred_region
          %220 = dma.done [#allocation6], 1024
        $region44: #{tpu_custom_call.1} parent=35 // pred_fallthru
          _
        // Predicated region
        $region45: #{tpu_custom_call.1} parent=35 // pred_check
          %p221 = pneg %p85
        $region46: #{tpu_custom_call.1} parent=35 // pred_check_branch
          %223 = sbr.rel (%p221) target = $region48
        $region47: #{tpu_custom_call.1} parent=35 // pred_region
          %224 = dma.done [#allocation6], 1024
        $region48: #{tpu_custom_call.1} parent=35 // pred_fallthru
          _
        %s225 = sand.u32 %s30, 1
        %s226 = scalar_lea.sflag [#allocation3], %s225
        %s227 = sand.u32 %s30, 1
        %s228 = smul.addr %s227, 32
        %s229 = scalar_lea.vmem [#allocation2], %s228
        %p230 = pneg %p43
        %p231 = pneg %p40
        %p232 = pneg %p64
        %p233 = pneg %p61
        %p234 = pneg %p85
        %p235 = pneg %p82
        %p236 = pneg %p106
        %p237 = pneg %p103
        %p238 = pneg %p132
        %p239 = pneg %p129
        %s240 = sand.u32 %s119, 1
        %s241 = scalar_lea.sflag [#allocation4], %s240
        %s242 = sand.u32 %s119, 1
        %s243 = smul.addr %s242, 32
        %s244 = scalar_lea.vmem [#allocation8], %s243
        %s245 = smul.u32 8, %s22
        %s246 = smul.u32 8, %s22
        %v248 = vld [vmem:[%s212] sm:$0xf]
        %v249 = vld [vmem:[%s212 + $0x4] sm:$0xf]
        %v250 = vld [vmem:[%s212 + $0x8] sm:$0xf]
        %v251 = vld [vmem:[%s212 + $0xc] sm:$0xf]
        %v252 = vld [vmem:[%s212 + $0x10] sm:$0xf]
        %v253 = vld [vmem:[%s212 + $0x14] sm:$0xf]
        %v254 = vld [vmem:[%s212 + $0x18] sm:$0xf]
        %v255 = vld [vmem:[%s212 + $0x1c] sm:$0xf]
        %v256 = vld [vmem:[#allocation5] sm:$0xf]
        %v257 = vld [vmem:[#allocation5 + $0x4] sm:$0xf]
        %v258 = vld [vmem:[#allocation5 + $0x8] sm:$0xf]
        %v259 = vld [vmem:[#allocation5 + $0xc] sm:$0xf]
        %v260 = vld [vmem:[#allocation5 + $0x10] sm:$0xf]
        %v261 = vld [vmem:[#allocation5 + $0x14] sm:$0xf]
        %v262 = vld [vmem:[#allocation5 + $0x18] sm:$0xf]
        %v263 = vld [vmem:[#allocation5 + $0x1c] sm:$0xf]
        %v264 = vld [vmem:[#allocation5 + $0x20] sm:$0xf]
        %v265 = vld [vmem:[#allocation5 + $0x24] sm:$0xf]
        %v266 = vld [vmem:[#allocation5 + $0x28] sm:$0xf]
        %v267 = vld [vmem:[#allocation5 + $0x2c] sm:$0xf]
        %v268 = vld [vmem:[#allocation5 + $0x30] sm:$0xf]
        %v269 = vld [vmem:[#allocation5 + $0x34] sm:$0xf]
        %v270 = vld [vmem:[#allocation5 + $0x38] sm:$0xf]
        %v271 = vld [vmem:[#allocation5 + $0x3c] sm:$0xf]
        %v280 = vunpack.c.l.b16 %v248
        %v281 = vunpack.c.l.b16 %v249
        %v282 = vunpack.c.l.b16 %v250
        %v283 = vunpack.c.l.b16 %v251
        %v284 = vunpack.c.l.b16 %v252
        %v285 = vunpack.c.l.b16 %v253
        %v286 = vunpack.c.l.b16 %v254
        %v287 = vunpack.c.l.b16 %v255
        %v288 = vpack.c.b16 %v281, %v280
        %v289 = vpack.c.b16 %v283, %v282
        %v290 = vpack.c.b16 %v285, %v284
        %v291 = vpack.c.b16 %v287, %v286
        %v312 = vunpack.c.l.b16 %v256
        %v313 = vunpack.c.l.b16 %v257
        %v314 = vunpack.c.l.b16 %v258
        %v315 = vunpack.c.l.b16 %v259
        %v316 = vunpack.c.l.b16 %v260
        %v317 = vunpack.c.l.b16 %v261
        %v318 = vunpack.c.l.b16 %v262
        %v319 = vunpack.c.l.b16 %v263
        %v320 = vunpack.c.l.b16 %v264
        %v321 = vunpack.c.l.b16 %v265
        %v322 = vunpack.c.l.b16 %v266
        %v323 = vunpack.c.l.b16 %v267
        %v324 = vunpack.c.l.b16 %v268
        %v325 = vunpack.c.l.b16 %v269
        %v326 = vunpack.c.l.b16 %v270
        %v327 = vunpack.c.l.b16 %v271
        %v328 = vpack.c.b16 %v313, %v312
        %v329 = vpack.c.b16 %v315, %v314
        %v330 = vpack.c.b16 %v317, %v316
        %v331 = vpack.c.b16 %v319, %v318
        %v332 = vpack.c.b16 %v321, %v320
        %v333 = vpack.c.b16 %v323, %v322
        %v334 = vpack.c.b16 %v325, %v324
        %v335 = vpack.c.b16 %v327, %v326
        %344 = vmatprep.subr.bf16.mxu0 0
        %345 = vmatpush1.bf16.msra.mxu0 %v328
        %346 = vmatprep.subr.bf16.mxu0 0
        %347 = vmatpush1.bf16.msra.mxu0 %v329
        %348 = vmatprep.subr.bf16.mxu0 0
        %349 = vmatpush1.bf16.msra.mxu0 %v330
        %350 = vmatprep.subr.bf16.mxu0 0
        %351 = vmatpush1.bf16.msra.mxu0 %v331
        %352 = vmatprep.subr.bf16.mxu0 0
        %353 = vmatpush1.bf16.msra.mxu0 %v332
        %354 = vmatprep.subr.bf16.mxu0 0
        %355 = vmatpush1.bf16.msra.mxu0 %v333
        %356 = vmatprep.subr.bf16.mxu0 0
        %357 = vmatpush1.bf16.msra.mxu0 %v334
        %358 = vmatprep.subr.bf16.mxu0 0
        %359 = vmatpush1.bf16.msra.mxu0 %v335
        %360 = vmatprep.subr.bf16.mxu0 0
        %361 = vmatpush1.bf16.msra.mxu0 0
        %362 = vmatprep.subr.bf16.mxu0 0
        %363 = vmatpush1.bf16.msra.mxu0 0
        %364 = vmatprep.subr.bf16.mxu0 0
        %365 = vmatpush1.bf16.msra.mxu0 0
        %366 = vmatprep.subr.bf16.mxu0 0
        %367 = vmatpush1.bf16.msra.mxu0 0
        %368 = vmatprep.subr.bf16.mxu0 0
        %369 = vmatpush1.bf16.msra.mxu0 0
        %370 = vmatprep.subr.bf16.mxu0 0
        %371 = vmatpush1.bf16.msra.mxu0 0
        %372 = vmatprep.subr.bf16.mxu0 0
        %373 = vmatpush1.bf16.msra.mxu0 0
        %374 = vmatprep.subr.bf16.mxu0 0
        %375 = vmatpush1.bf16.msra.mxu0 0
        %376 = vmatprep.mubr.bf16.mxu0 0
        %377 = vmatmul.mubr.bf16.gmra.mrb[0].mxu0 %v288
        %v378 = vpop.f32.mrb[0].mxu0
        %v379 = vadd.f32 0.0, %v378
        %v380 = vpop.f32.mrb[0].mxu0
        %v381 = vpop.f32.mrb[0].mxu0
        %v382 = vadd.f32 0.0, %v381
        %v383 = vpop.f32.mrb[0].mxu0
        %384 = vmatprep.mubr.bf16.mxu0 0
        %385 = vmatmul.mubr.bf16.gmra.mrb[0].mxu0 %v289
        %v386 = vpop.f32.mrb[0].mxu0
        %v387 = vadd.f32 0.0, %v386
        %v388 = vpop.f32.mrb[0].mxu0
        %v389 = vpop.f32.mrb[0].mxu0
        %v390 = vadd.f32 0.0, %v389
        %v391 = vpop.f32.mrb[0].mxu0
        %392 = vmatprep.mubr.bf16.mxu0 0
        %393 = vmatmul.mubr.bf16.gmra.mrb[0].mxu0 %v290
        %v394 = vpop.f32.mrb[0].mxu0
        %v395 = vadd.f32 0.0, %v394
        %v396 = vpop.f32.mrb[0].mxu0
        %v397 = vpop.f32.mrb[0].mxu0
        %v398 = vadd.f32 0.0, %v397
        %v399 = vpop.f32.mrb[0].mxu0
        %400 = vmatprep.mubr.bf16.mxu0 0
        %401 = vmatmul.mubr.bf16.gmra.mrb[0].mxu0 %v291
        %v402 = vpop.f32.mrb[0].mxu0
        %v403 = vadd.f32 0.0, %v402
        %v404 = vpop.f32.mrb[0].mxu0
        %v405 = vpop.f32.mrb[0].mxu0
        %v406 = vadd.f32 0.0, %v405
        %v407 = vpop.f32.mrb[0].mxu0
        %408 = vdwg.mxu0
        %v409 = vpack.c.bf16 %v382, %v379
        %v410 = vpack.c.bf16 %v390, %v387
        %v411 = vpack.c.bf16 %v398, %v395
        %v412 = vpack.c.bf16 %v406, %v403
        %v413 = vld [vmem:[#allocation7] sm:$0xf]
        %v414 = vld [vmem:[#allocation7 + $0x4] sm:$0xf]
        %v415 = vld [vmem:[#allocation7 + $0x8] sm:$0xf]
        %v416 = vld [vmem:[#allocation7 + $0xc] sm:$0xf]
        %v417 = vld [vmem:[#allocation7 + $0x10] sm:$0xf]
        %v418 = vld [vmem:[#allocation7 + $0x14] sm:$0xf]
        %v419 = vld [vmem:[#allocation7 + $0x18] sm:$0xf]
        %v420 = vld [vmem:[#allocation7 + $0x1c] sm:$0xf]
        %v421 = vld [vmem:[#allocation7 + $0x20] sm:$0xf]
        %v422 = vld [vmem:[#allocation7 + $0x24] sm:$0xf]
        %v423 = vld [vmem:[#allocation7 + $0x28] sm:$0xf]
        %v424 = vld [vmem:[#allocation7 + $0x2c] sm:$0xf]
        %v425 = vld [vmem:[#allocation7 + $0x30] sm:$0xf]
        %v426 = vld [vmem:[#allocation7 + $0x34] sm:$0xf]
        %v427 = vld [vmem:[#allocation7 + $0x38] sm:$0xf]
        %v428 = vld [vmem:[#allocation7 + $0x3c] sm:$0xf]
        %v429 = vld [vmem:[%s3] sm:$0x1]
        %v431 = vlaneseq
        %v432 = vshrl.u32 %v431, 7
        %v433 = vsub.s32 0, %v432
        %v434 = vrot.slane %v429, %v433
        %v452 = vunpack.c.l.b16 %v413
        %v453 = vunpack.c.l.b16 %v414
        %v454 = vunpack.c.l.b16 %v415
        %v455 = vunpack.c.l.b16 %v416
        %v456 = vunpack.c.l.b16 %v417
        %v457 = vunpack.c.l.b16 %v418
        %v458 = vunpack.c.l.b16 %v419
        %v459 = vunpack.c.l.b16 %v420
        %v460 = vunpack.c.l.b16 %v421
        %v461 = vunpack.c.l.b16 %v422
        %v462 = vunpack.c.l.b16 %v423
        %v463 = vunpack.c.l.b16 %v424
        %v464 = vunpack.c.l.b16 %v425
        %v465 = vunpack.c.l.b16 %v426
        %v466 = vunpack.c.l.b16 %v427
        %v467 = vunpack.c.l.b16 %v428
        %v468 = vpack.c.b16 %v453, %v452
        %v469 = vpack.c.b16 %v455, %v454
        %v470 = vpack.c.b16 %v457, %v456
        %v471 = vpack.c.b16 %v459, %v458
        %v472 = vpack.c.b16 %v461, %v460
        %v473 = vpack.c.b16 %v463, %v462
        %v474 = vpack.c.b16 %v465, %v464
        %v475 = vpack.c.b16 %v467, %v466
        %484 = vmatprep.subr.bf16.mxu0 0
        %485 = vmatpush1.bf16.msra.mxu0 %v468
        %486 = vmatprep.subr.bf16.mxu0 0
        %487 = vmatpush1.bf16.msra.mxu0 %v469
        %488 = vmatprep.subr.bf16.mxu0 0
        %489 = vmatpush1.bf16.msra.mxu0 %v470
        %490 = vmatprep.subr.bf16.mxu0 0
        %491 = vmatpush1.bf16.msra.mxu0 %v471
        %492 = vmatprep.subr.bf16.mxu0 0
        %493 = vmatpush1.bf16.msra.mxu0 %v472
        %494 = vmatprep.subr.bf16.mxu0 0
        %495 = vmatpush1.bf16.msra.mxu0 %v473
        %496 = vmatprep.subr.bf16.mxu0 0
        %497 = vmatpush1.bf16.msra.mxu0 %v474
        %498 = vmatprep.subr.bf16.mxu0 0
        %499 = vmatpush1.bf16.msra.mxu0 %v475
        %500 = vmatprep.subr.bf16.mxu0 0
        %501 = vmatpush1.bf16.msra.mxu0 0
        %502 = vmatprep.subr.bf16.mxu0 0
        %503 = vmatpush1.bf16.msra.mxu0 0
        %504 = vmatprep.subr.bf16.mxu0 0
        %505 = vmatpush1.bf16.msra.mxu0 0
        %506 = vmatprep.subr.bf16.mxu0 0
        %507 = vmatpush1.bf16.msra.mxu0 0
        %508 = vmatprep.subr.bf16.mxu0 0
        %509 = vmatpush1.bf16.msra.mxu0 0
        %510 = vmatprep.subr.bf16.mxu0 0
        %511 = vmatpush1.bf16.msra.mxu0 0
        %512 = vmatprep.subr.bf16.mxu0 0
        %513 = vmatpush1.bf16.msra.mxu0 0
        %514 = vmatprep.subr.bf16.mxu0 0
        %515 = vmatpush1.bf16.msra.mxu0 0
        %516 = vmatprep.mubr.bf16.mxu0 0
        %517 = vmatmul.mubr.bf16.gmra.mrb[0].mxu0 %v409
        %v518 = vpop.f32.mrb[0].mxu0
        %v519 = vadd.f32 %v434, %v518
        %v520 = vpop.f32.mrb[0].mxu0
        %v521 = vpop.f32.mrb[0].mxu0
        %v522 = vadd.f32 %v434, %v521
        %v523 = vpop.f32.mrb[0].mxu0
        %524 = vmatprep.mubr.bf16.mxu0 0
        %525 = vmatmul.mubr.bf16.gmra.mrb[0].mxu0 %v410
        %v526 = vpop.f32.mrb[0].mxu0
        %v527 = vadd.f32 %v434, %v526
        %v528 = vpop.f32.mrb[0].mxu0
        %v529 = vpop.f32.mrb[0].mxu0
        %v530 = vadd.f32 %v434, %v529
        %v531 = vpop.f32.mrb[0].mxu0
        %532 = vmatprep.mubr.bf16.mxu0 0
        %533 = vmatmul.mubr.bf16.gmra.mrb[0].mxu0 %v411
        %v534 = vpop.f32.mrb[0].mxu0
        %v535 = vadd.f32 %v434, %v534
        %v536 = vpop.f32.mrb[0].mxu0
        %v537 = vpop.f32.mrb[0].mxu0
        %v538 = vadd.f32 %v434, %v537
        %v539 = vpop.f32.mrb[0].mxu0
        %540 = vmatprep.mubr.bf16.mxu0 0
        %541 = vmatmul.mubr.bf16.gmra.mrb[0].mxu0 %v412
        %v542 = vpop.f32.mrb[0].mxu0
        %v543 = vadd.f32 %v434, %v542
        %v544 = vpop.f32.mrb[0].mxu0
        %v545 = vpop.f32.mrb[0].mxu0
        %v546 = vadd.f32 %v434, %v545
        %v547 = vpop.f32.mrb[0].mxu0
        %548 = vdwg.mxu0
        %v549 = vmax.f32 %v519, 0.0
        %v550 = vmax.f32 %v522, 0.0
        %v551 = vmax.f32 %v527, 0.0
        %v552 = vmax.f32 %v530, 0.0
        %v553 = vmax.f32 %v535, 0.0
        %v554 = vmax.f32 %v538, 0.0
        %v555 = vmax.f32 %v543, 0.0
        %v556 = vmax.f32 %v546, 0.0
        %v557 = vpack.c.bf16 %v550, %v549
        %v558 = vpack.c.bf16 %v552, %v551
        %v559 = vpack.c.bf16 %v554, %v553
        %v560 = vpack.c.bf16 %v556, %v555
        %v565 = vunpack.c.l.b16 %v557
        %v566 = vunpack.c.h.b16 %v557
        %v567 = vunpack.c.l.b16 %v558
        %v568 = vunpack.c.h.b16 %v558
        %v569 = vunpack.c.l.b16 %v559
        %v570 = vunpack.c.h.b16 %v559
        %v571 = vunpack.c.l.b16 %v560
        %v572 = vunpack.c.h.b16 %v560
        %v573 = vpack.c.b16 %v565, %v565
        %v574 = vpack.c.b16 %v566, %v566
        %v575 = vpack.c.b16 %v567, %v567
        %v576 = vpack.c.b16 %v568, %v568
        %v577 = vpack.c.b16 %v569, %v569
        %v578 = vpack.c.b16 %v570, %v570
        %v579 = vpack.c.b16 %v571, %v571
        %v580 = vpack.c.b16 %v572, %v572
        %589 = vst [vmem:[%s244] sm:$0xf] %v573
        %590 = vst [vmem:[%s244 + $0x4] sm:$0xf] %v574
        %591 = vst [vmem:[%s244 + $0x8] sm:$0xf] %v575
        %592 = vst [vmem:[%s244 + $0xc] sm:$0xf] %v576
        %593 = vst [vmem:[%s244 + $0x10] sm:$0xf] %v577
        %594 = vst [vmem:[%s244 + $0x14] sm:$0xf] %v578
        %595 = vst [vmem:[%s244 + $0x18] sm:$0xf] %v579
        %596 = vst [vmem:[%s244 + $0x1c] sm:$0xf] %v580
        %s597 = sand.u32 %s119, 1
        %s598 = scalar_lea.sflag [#allocation4], %s597
        %s599 = sand.u32 %s119, 1
        %s600 = smul.addr %s599, 32
        %s601 = scalar_lea.vmem [#allocation8], %s600
        // Predicated region
        $region49: #{tpu_custom_call.1} parent=35 // pred_check
          %p602 = pneg %p129
        $region50: #{tpu_custom_call.1} parent=35 // pred_check_branch
          %604 = sbr.rel (%p602) target = $region52
        $region51: #{tpu_custom_call.1} parent=35 // pred_region
          %s605 = smul.u32 8, %s22
          %s607 = ssub.s32 512, 512
          %608 = vsyncadd %s598, %s607
          %s609 = smul.addr %s605, 64
          %s610 = scalar_lea.hbm %s4, %s609
          %s611 = sshll.u32 %s601, 4
          %s612 = int_to_ptr.vmem [resolvable:$true] %s611
          %617 = dma.vmem_to_hbm [thread:$0]  %s612, 512, %s610, %s598, 64, 64, 4
        $region52: #{tpu_custom_call.1} parent=35 // pred_fallthru
          _
      $region36: #{tpu_custom_call.1} parent=5 // pred_fallthru
        _
      %p618 = scmp.le.s32.totalorder 2, %s17
      // Predicated region
      $region53: #{tpu_custom_call.1} parent=5 // pred_check
        %p619 = pneg %p618
      $region54: #{tpu_custom_call.1} parent=5 // pred_check_branch
        %621 = sbr.rel (%p619) target = $region56
      $region55: #{tpu_custom_call.1} parent=5 // pred_region
        %s622 = ssub.s32 %s17, 2
        // Predicated region
        $region57: #{tpu_custom_call.1} parent=55 // pred_check
          %p623 = pneg %p135
        $region58: #{tpu_custom_call.1} parent=55 // pred_check_branch
          %625 = sbr.rel (%p623) target = $region60
        $region59: #{tpu_custom_call.1} parent=55 // pred_region
          %s626 = sand.u32 %s120, 1
          %s627 = scalar_lea.sflag [#allocation4], %s626
          %s628 = sand.u32 %s120, 1
          %s629 = smul.addr %s628, 32
          %s630 = scalar_lea.vmem [#allocation8], %s629
          %631 = dma.done %s627, 512
        $region60: #{tpu_custom_call.1} parent=55 // pred_fallthru
          _
      $region56: #{tpu_custom_call.1} parent=5 // pred_fallthru
        _
    $region6: #{tpu_custom_call.1} parent=1 // loop_footer
      %s21 = sadd.s32 1, %s17
    $region7: #{tpu_custom_call.1} parent=1 // loop_footer_branch
      %16 = sbr.rel target = $region3
    $region8: #{tpu_custom_call.1} parent=1 // loop_exit
      _
    %632 = vsyncpa [#allocation3], 1
    %s633 = scalar_lea.sflag [#allocation3], 1
    %634 = vsyncpa %s633, 1
    %635 = vsyncpa [#allocation6], 1
    %636 = vsyncpa [#allocation4], 1
    %s637 = scalar_lea.sflag [#allocation4], 1
    %638 = vsyncpa %s637, 1

</llo_original>
